<compile_context>
chip_gen: v5e
topology: v5e:2x2
jax: 0.10.0
libtpu: 0.0.40
codegen_flags: <defaults>
</compile_context>

<pallas_src>
import jax
import jax.numpy as jnp
from jax.experimental import pallas as pl
from jax.experimental.pallas import tpu as pltpu

EPS = 0.8  # nn.BatchNorm2d(out_feat, 0.8): second positional arg is eps

# Output-parity decomposition of ConvTranspose2d(K=3, stride=2, pad=1).
# Output (oy, ox) = (2*i + py, 2*j + px); tap (ky, kx) reads input pixel (i+di, j+dj).
_PARITY_TAPS = {
    (0, 0): [(1, 1, 0, 0)],
    (0, 1): [(1, 0, 0, 1), (1, 2, 0, 0)],
    (1, 0): [(0, 1, 1, 0), (2, 1, 0, 0)],
    (1, 1): [(0, 0, 1, 1), (0, 2, 1, 0), (2, 0, 0, 1), (2, 2, 0, 0)],
}
# Shared shifted views of x (also the parity order p = py*2 + px).
_SHIFTS = ((0, 0), (0, 1), (1, 0), (1, 1))


def _round_up(a, b):
    return (a + b - 1) // b * b


def _cdiv(a, b):
    return (a + b - 1) // b


def _per_col_vmem_bytes(cin, cout):
    """Rough per-pixel-column VMEM footprint of one pipelined step (sublane-padded)."""
    kk, cc = 4 * cin, 4 * cout
    cols_b = _round_up(kk, 16) * 2          # cols^T tile, bf16
    mask_b = 4 * 8 * 4                      # (4,1,t) mask, f32, padded to 8 sublanes
    y_b = _round_up(cc, 16) * 2             # y tile, bf16
    acc_b = 2 * 4 * _round_up(cout, 8) * 4  # sum + ssq accumulators, f32
    return 2 * (cols_b + mask_b + y_b) + 2 * acc_b   # x2: double buffering (conservative)


def _pick_tile_m(m, cin, cout):
    budget = 20 * 1024 * 1024
    t = budget // max(1, _per_col_vmem_bytes(cin, cout))
    t = max(128, min(16384, (t // 128) * 128))
    half = _round_up(max(1, _cdiv(m, 2)), 128)   # keep both grid "cores" busy
    return max(128, min(t, half))


def _conv_stats_kernel(w_ref, cols_ref, mask_ref, y_ref, sum_ref, ssq_ref):
    """One fused matmul for all 4 output parities + masked BN-stat accumulation.

    w_ref:    (4*Cout, 4*Cin)  bf16, block-diagonal-by-shift weight (resident)
    cols_ref: (4*Cin,  tile_m) bf16, shared shifted-view columns
    mask_ref: (4, 1,   tile_m) f32, per-parity validity (kills edge/tail junk)
    y_ref:    (4*Cout, tile_m) bf16 output (conv result, junk zeroed)
    sum_ref / ssq_ref: (4, Cout, tile_m) f32 grid-resident per-core accumulators
    """
    @pl.when(pl.program_id(1) == 0)
    def _init():
        sum_ref[...] = jnp.zeros_like(sum_ref)
        ssq_ref[...] = jnp.zeros_like(ssq_ref)

    y = jnp.dot(w_ref[...], cols_ref[...], preferred_element_type=jnp.float32)
    ym = y.reshape(sum_ref.shape) * mask_ref[...]          # (4, Cout, t), junk -> 0
    y_ref[...] = ym.reshape(y_ref.shape).astype(y_ref.dtype)
    sum_ref[...] += ym
    ssq_ref[...] += ym * ym


def deconv_forward(x_nchw, W, b, gamma, beta, *, kernel=3, step=2, pad=1):
    """Forward of the PyTorch `deconv` module (ConvTranspose2d + BN(train) + ReLU).

    x_nchw: (N, Cin, H, W); W: (Cin, Cout, K, K) (ConvTranspose2d layout).
    `b` is folded out: a per-channel conv bias cancels exactly under train-mode
    BatchNorm centering (would NOT be valid for eval-mode/running-stats BN).
    """
    del b
    assert kernel == 3 and step == 2 and pad == 1, "parity decomposition assumes k=3, s=2, p=1"
    N, Cin, H, Wd = x_nchw.shape
    Cout = W.shape[1]
    Ho, Wo = 2 * H - 1, 2 * Wd - 1
    M = N * H * Wd                      # base-pixel count per parity
    count = float(N * Ho * Wo)          # TRUE pixel count for BN statistics

    tile_m = _pick_tile_m(M, Cin, Cout)
    n_half = max(1, _cdiv(M, 2 * tile_m))
    m_pad = 2 * n_half * tile_m

    # ---- glue: shared cols^T, block weight, validity mask (all lane-dense) ----
    # x transposed + padded + cast ONCE (review: hoist out of the per-tap loop).
    xt = jnp.pad(jnp.transpose(x_nchw, (1, 0, 2, 3)).astype(jnp.bfloat16),
                 ((0, 0), (0, 0), (0, 1), (0, 1)))                    # (Cin, N, H+1, W+1)
    cols = jnp.concatenate(
        [xt[:, :, di:di + H, dj:dj + Wd].reshape(Cin, M) for di, dj in _SHIFTS],
        axis=0)                                                       # (4*Cin, M)
    cols = jnp.pad(cols, ((0, 0), (0, m_pad - M)))

    # Block weight: row block p = output parity, col block d = input shift.
    w_big = jnp.zeros((4, Cout, 4, Cin), jnp.float32)
    for (py, px), taps in _PARITY_TAPS.items():
        p = py * 2 + px
        for (ky, kx, di, dj) in taps:
            d = di * 2 + dj
            w_big = w_big.at[p, :, d, :].set(W[:, :, ky, kx].T)
    w_big = w_big.reshape(4 * Cout, 4 * Cin).astype(jnp.bfloat16)

    # Per-(parity, base pixel) validity: output (2i+py, 2j+px) exists iff i<H-py, j<W-px.
    m_idx = jnp.arange(m_pad, dtype=jnp.int32)
    ii = jnp.where(m_idx < M, (m_idx // Wd) % H, H)
    jj = jnp.where(m_idx < M, m_idx % Wd, Wd)
    mask = jnp.stack([((ii < H - py) & (jj < Wd - px)).astype(jnp.float32)
                      for (py, px) in _SHIFTS], axis=0).reshape(4, 1, m_pad)

    # Right-sized VMEM limit from the actual footprint (review item 6).
    vmem_limit = int(min(48 * 1024 * 1024,
                         max(16 * 1024 * 1024,
                             _per_col_vmem_bytes(Cin, Cout) * tile_m
                             + 2 * (4 * Cout) * (4 * Cin) * 2
                             + 8 * 1024 * 1024)))
    cparams = pltpu.CompilerParams(
        dimension_semantics=("parallel", "arbitrary"),   # 2 TC halves x pixel tiles
        vmem_limit_bytes=vmem_limit)

    # ---- single Pallas pass: conv (all parities) + per-core BN-stat partials ----
    y_big, sums, ssqs = pl.pallas_call(
        _conv_stats_kernel,
        grid=(2, n_half),
        in_specs=[
            pl.BlockSpec((4 * Cout, 4 * Cin), lambda c, j: (0, 0)),
            pl.BlockSpec((4 * Cin, tile_m), lambda c, j: (0, c * n_half + j)),
            pl.BlockSpec((4, 1, tile_m), lambda c, j: (0, 0, c * n_half + j)),
        ],
        out_specs=[
            pl.BlockSpec((4 * Cout, tile_m), lambda c, j: (0, c * n_half + j)),
            pl.BlockSpec((4, Cout, tile_m), lambda c, j: (c, 0, 0)),   # per-core partials
            pl.BlockSpec((4, Cout, tile_m), lambda c, j: (c, 0, 0)),
        ],
        out_shape=(
            jax.ShapeDtypeStruct((4 * Cout, m_pad), jnp.bfloat16),     # bf16 y (review 1)
            jax.ShapeDtypeStruct((2 * 4, Cout, tile_m), jnp.float32),
            jax.ShapeDtypeStruct((2 * 4, Cout, tile_m), jnp.float32),
        ),
        compiler_params=cparams,
    )(w_big, cols, mask)

    # ---- finalize BN scale/shift ONCE (tiny reduction; review item 2) ----
    sum_c = jnp.sum(sums, axis=(0, 2))                    # (Cout,)
    ssq_c = jnp.sum(ssqs, axis=(0, 2))
    mean = sum_c / count
    # NOTE: E[y^2]-mean^2 in f32; eps=0.8 dominates, clamp guards tiny negatives.
    var = jnp.maximum(ssq_c / count - mean * mean, 0.0)
    scale = gamma.astype(jnp.float32) * jax.lax.rsqrt(var + EPS)
    shift = beta.astype(jnp.float32) - mean * scale

    # ---- fused epilogue (review items 8 + 9): BN apply + ReLU + parity interleave +
    # NCHW transpose as ONE XLA elementwise+transpose pass (no extra y round trip) ----
    y = y_big.reshape(4, Cout, m_pad)[:, :, :M].astype(jnp.float32)
    z = jnp.maximum(y * scale[None, :, None] + shift[None, :, None], 0.0)
    z = z.reshape(2, 2, Cout, N, H, Wd)                   # (py, px, c, n, i, j)
    z = jnp.transpose(z, (3, 2, 4, 0, 5, 1)).reshape(N, Cout, 2 * H, 2 * Wd)
    return z[:, :, :Ho, :Wo]


def reference(x, W, b, gamma, beta, *, kernel=3, step=2, pad=1):
    """Pure-JAX reference mirroring the PyTorch module (training-mode BN)."""
    K = kernel
    w_conv = jnp.flip(W, (2, 3)).transpose(1, 0, 2, 3)    # (Cout, Cin, K, K)
    y = jax.lax.conv_general_dilated(
        x, w_conv, window_strides=(1, 1),
        padding=[(K - 1 - pad, K - 1 - pad)] * 2,
        lhs_dilation=(step, step),
        dimension_numbers=("NCHW", "OIHW", "NCHW"))
    y = y + b.reshape(1, -1, 1, 1)
    mean = y.mean(axis=(0, 2, 3), keepdims=True)
    var = ((y - mean) ** 2).mean(axis=(0, 2, 3), keepdims=True)
    z = (y - mean) / jnp.sqrt(var + EPS)
    z = z * gamma.reshape(1, -1, 1, 1) + beta.reshape(1, -1, 1, 1)
    return jnp.maximum(z, 0.0)


if __name__ == "__main__":
    key = jax.random.PRNGKey(0)
    k1, k2, k3, k4, k5 = jax.random.split(key, 5)

    N, Cin, H, Wd = 2, 4, 16, 16
    Cout, K = 8, 3

    x = jax.random.normal(k1, (N, Cin, H, Wd), jnp.float32)
    bound = float(1.0 / (Cin * K * K) ** 0.5)
    W = jax.random.uniform(k2, (Cin, Cout, K, K), jnp.float32, -bound, bound)
    b = jax.random.uniform(k3, (Cout,), jnp.float32, -bound, bound)
    gamma = jax.random.uniform(k4, (Cout,), jnp.float32, 0.5, 1.5)
    beta = jax.random.uniform(k5, (Cout,), jnp.float32, -0.5, 0.5)

    out = jax.jit(deconv_forward)(x, W, b, gamma, beta)
    out = jax.block_until_ready(out)

    Ho = (H - 1) * 2 - 2 * 1 + K
    assert out.shape == (N, Cout, Ho, Ho), out.shape

    ref = reference(x, W, b, gamma, beta)
    err = float(jnp.max(jnp.abs(out - ref)))
    assert err < 2e-2, f"max abs err {err}"   # bf16 matmul inputs + bf16 y storage

    print("KERNEL_OK")
</pallas_src>

<mosaic_0001>
module attributes {stable_mosaic.version = 11 : i64} {
  func.func @_conv_stats_kernel(%arg0: i32, %arg1: i32, %arg2: memref<32x16xbf16, #tpu.memory_space<vmem>>, %arg3: memref<16x256xbf16, #tpu.memory_space<vmem>>, %arg4: memref<4x1x256xf32, #tpu.memory_space<vmem>>, %arg5: memref<32x256xbf16, #tpu.memory_space<vmem>>, %arg6: memref<4x8x256xf32, #tpu.memory_space<vmem>>, %arg7: memref<4x8x256xf32, #tpu.memory_space<vmem>>) attributes {dimension_semantics = [#tpu.dimension_semantics<parallel>, #tpu.dimension_semantics<arbitrary>], iteration_bounds = array<i64: 2, 1>, scalar_prefetch = 0 : i64, scratch_operands = 0 : i64, tpu.core_type = #tpu.core_type<tc>, window_params = [{pipeline_mode = #tpu.pipeline_mode<synchronous>, transform_indices = @transform_0, window_bounds = array<i64: 32, 16>}, {transform_indices = @transform_1, window_bounds = array<i64: 16, 256>}, {transform_indices = @transform_2, window_bounds = array<i64: 4, 1, 256>}, {transform_indices = @transform_3, window_bounds = array<i64: 32, 256>}, {transform_indices = @transform_4, window_bounds = array<i64: 4, 8, 256>}, {transform_indices = @transform_5, window_bounds = array<i64: 4, 8, 256>}]} {
    %c0_i32 = arith.constant 0 : i32
    %0 = arith.cmpi eq, %arg1, %c0_i32 : i32
    %1 = arith.extui %0 : i1 to i32
    %c0_i32_0 = arith.constant 0 : i32
    %2 = arith.cmpi ne, %1, %c0_i32_0 : i32
    scf.if %2 {
      %cst_21 = arith.constant 0.000000e+00 : f32
      %20 = vector.broadcast %cst_21 : f32 to vector<4x8x256xf32>
      %c0_22 = arith.constant 0 : index
      %c0_23 = arith.constant 0 : index
      %c0_24 = arith.constant 0 : index
      %21 = vector.load %arg6[%c0_22, %c0_23, %c0_24] : memref<4x8x256xf32, #tpu.memory_space<vmem>>, vector<4x8x256xf32>
      tpu.vector_store %arg6[%c0_22, %c0_23, %c0_24], %20 {strides = array<i32>} : memref<4x8x256xf32, #tpu.memory_space<vmem>>, vector<4x8x256xf32>,
      %cst_25 = arith.constant 0.000000e+00 : f32
      %22 = vector.broadcast %cst_25 : f32 to vector<4x8x256xf32>
      %c0_26 = arith.constant 0 : index
      %c0_27 = arith.constant 0 : index
      %c0_28 = arith.constant 0 : index
      %23 = vector.load %arg7[%c0_26, %c0_27, %c0_28] : memref<4x8x256xf32, #tpu.memory_space<vmem>>, vector<4x8x256xf32>
      tpu.vector_store %arg7[%c0_26, %c0_27, %c0_28], %22 {strides = array<i32>} : memref<4x8x256xf32, #tpu.memory_space<vmem>>, vector<4x8x256xf32>,
    } else {
    }
    %c0 = arith.constant 0 : index
    %c0_1 = arith.constant 0 : index
    %3 = vector.load %arg2[%c0, %c0_1] : memref<32x16xbf16, #tpu.memory_space<vmem>>, vector<32x16xbf16>
    %c0_2 = arith.constant 0 : index
    %c0_3 = arith.constant 0 : index
    %4 = vector.load %arg3[%c0_2, %c0_3] : memref<16x256xbf16, #tpu.memory_space<vmem>>, vector<16x256xbf16>
    %cst = arith.constant dense<0.000000e+00> : vector<32x256xf32>
    %5 = tpu.matmul %3, %4, %cst {dimension_numbers = #tpu.dot_dimension_numbers<[1], [0], [0], [1], [0, 0, 1, 1], [], []>} : vector<32x16xbf16>, vector<16x256xbf16>, vector<32x256xf32> -> vector<32x256xf32>
    %6 = vector.shape_cast %5 : vector<32x256xf32> to vector<4x8x256xf32>
    %c0_4 = arith.constant 0 : index
    %c0_5 = arith.constant 0 : index
    %c0_6 = arith.constant 0 : index
    %7 = vector.load %arg4[%c0_4, %c0_5, %c0_6] : memref<4x1x256xf32, #tpu.memory_space<vmem>>, vector<4x1x256xf32>
    %8 = vector.broadcast %7 : vector<4x1x256xf32> to vector<4x8x256xf32>
    %9 = arith.mulf %6, %8 : vector<4x8x256xf32>
    %10 = vector.shape_cast %9 : vector<4x8x256xf32> to vector<32x256xf32>
    %11 = arith.truncf %10 : vector<32x256xf32> to vector<32x256xbf16>
    %c0_7 = arith.constant 0 : index
    %c0_8 = arith.constant 0 : index
    %12 = vector.load %arg5[%c0_7, %c0_8] : memref<32x256xbf16, #tpu.memory_space<vmem>>, vector<32x256xbf16>
    tpu.vector_store %arg5[%c0_7, %c0_8], %11 {strides = array<i32>} : memref<32x256xbf16, #tpu.memory_space<vmem>>, vector<32x256xbf16>,
    %c0_9 = arith.constant 0 : index
    %c0_10 = arith.constant 0 : index
    %c0_11 = arith.constant 0 : index
    %13 = vector.load %arg6[%c0_9, %c0_10, %c0_11] : memref<4x8x256xf32, #tpu.memory_space<vmem>>, vector<4x8x256xf32>
    %14 = arith.addf %13, %9 : vector<4x8x256xf32>
    %c0_12 = arith.constant 0 : index
    %c0_13 = arith.constant 0 : index
    %c0_14 = arith.constant 0 : index
    %15 = vector.load %arg6[%c0_12, %c0_13, %c0_14] : memref<4x8x256xf32, #tpu.memory_space<vmem>>, vector<4x8x256xf32>
    tpu.vector_store %arg6[%c0_12, %c0_13, %c0_14], %14 {strides = array<i32>} : memref<4x8x256xf32, #tpu.memory_space<vmem>>, vector<4x8x256xf32>,
    %c0_15 = arith.constant 0 : index
    %c0_16 = arith.constant 0 : index
    %c0_17 = arith.constant 0 : index
    %16 = vector.load %arg7[%c0_15, %c0_16, %c0_17] : memref<4x8x256xf32, #tpu.memory_space<vmem>>, vector<4x8x256xf32>
    %17 = arith.mulf %9, %9 : vector<4x8x256xf32>
    %18 = arith.addf %16, %17 : vector<4x8x256xf32>
    %c0_18 = arith.constant 0 : index
    %c0_19 = arith.constant 0 : index
    %c0_20 = arith.constant 0 : index
    %19 = vector.load %arg7[%c0_18, %c0_19, %c0_20] : memref<4x8x256xf32, #tpu.memory_space<vmem>>, vector<4x8x256xf32>
    tpu.vector_store %arg7[%c0_18, %c0_19, %c0_20], %18 {strides = array<i32>} : memref<4x8x256xf32, #tpu.memory_space<vmem>>, vector<4x8x256xf32>,
    return
  }
  func.func @transform_0(%arg0: i32, %arg1: i32) -> (i32, i32) {
    %c0_i32 = arith.constant 0 : i32
    %c0_i32_0 = arith.constant 0 : i32
    %c0_i32_1 = arith.constant 0 : i32
    return %c0_i32, %c0_i32_0 : i32, i32
  }
  func.func @transform_1(%arg0: i32, %arg1: i32) -> (i32, i32) {
    %c1_i32 = arith.constant 1 : i32
    %0 = arith.muli %arg0, %c1_i32 : i32
    %1 = arith.addi %0, %arg1 : i32
    %c0_i32 = arith.constant 0 : i32
    %c0_i32_0 = arith.constant 0 : i32
    return %c0_i32, %1 : i32, i32
  }
  func.func @transform_2(%arg0: i32, %arg1: i32) -> (i32, i32, i32) {
    %c1_i32 = arith.constant 1 : i32
    %0 = arith.muli %arg0, %c1_i32 : i32
    %1 = arith.addi %0, %arg1 : i32
    %c0_i32 = arith.constant 0 : i32
    %c0_i32_0 = arith.constant 0 : i32
    %c0_i32_1 = arith.constant 0 : i32
    return %c0_i32, %c0_i32_0, %1 : i32, i32, i32
  }
  func.func @transform_3(%arg0: i32, %arg1: i32) -> (i32, i32) {
    %c1_i32 = arith.constant 1 : i32
    %0 = arith.muli %arg0, %c1_i32 : i32
    %1 = arith.addi %0, %arg1 : i32
    %c0_i32 = arith.constant 0 : i32
    %c0_i32_0 = arith.constant 0 : i32
    return %c0_i32, %1 : i32, i32
  }
  func.func @transform_4(%arg0: i32, %arg1: i32) -> (i32, i32, i32) {
    %c0_i32 = arith.constant 0 : i32
    %c0_i32_0 = arith.constant 0 : i32
    %c0_i32_1 = arith.constant 0 : i32
    return %arg0, %c0_i32, %c0_i32_0 : i32, i32, i32
  }
  func.func @transform_5(%arg0: i32, %arg1: i32) -> (i32, i32, i32) {
    %c0_i32 = arith.constant 0 : i32
    %c0_i32_0 = arith.constant 0 : i32
    %c0_i32_1 = arith.constant 0 : i32
    return %arg0, %c0_i32, %c0_i32_0 : i32, i32, i32
  }
}

</mosaic_0001>

<llo_original>
// kernel: deconv_forward.1
$region0: #{deconv_forward.1}
  #allocation0 [shape = 'u32[]', space=smem, size = 0x4, offset = 0x4, fixed_abs, tag = 'smem constant byte address 0x4 - core index']
  #allocation1 [shape = 'u32[72,128]{1,0:T(1,128)}', space=vmem, size = 0x9000, scoped, tag = 'internal scratch']
  %s0 = inlined_call_operand.vmem [shape: bf16[32,16], index: 0, kind: input, shape index: {}]
  %s1 = inlined_call_operand.vmem [shape: bf16[16,512], index: 1, kind: input, shape index: {}]
  %s2 = inlined_call_operand.vmem [shape: f32[4,1,512], index: 2, kind: input, shape index: {}]
  %s3 = inlined_call_operand.vmem [shape: bf16[32,512], index: 3, kind: output, shape index: {0}]
  %s4 = inlined_call_operand.vmem [shape: f32[8,8,256], index: 4, kind: output, shape index: {1}]
  %s5 = inlined_call_operand.vmem [shape: f32[8,8,256], index: 5, kind: output, shape index: {2}]
  %6 = xla_tuple %s3, %s4, %s5
  %s7 = sld [smem:[#allocation0]]
  $region178: #{deconv_forward.1} parent=0
    _
  %s9 = ssub.s32 1, %s7
  %s10 = scalar_select 0, %s9, %s7
  $region1: #{deconv_forward.1} parent=0
    #allocation2 [shape = 'u8[16384]{0}', space=vmem, size = 0x4000, scoped, tag = 'input window, operand 1']
    #allocation3 [shape = 'u8[8192]{0}', space=vmem, size = 0x2000, scoped, tag = 'input window, operand 2']
    #allocation4 [shape = 'u8[32768]{0}', space=vmem, size = 0x8000, scoped, tag = 'output window, operand 0']
    loop: start=0, step=1, limit=4
    $region2: #{deconv_forward.1} parent=1 // loop_pre_header
      _
    $region3: #{deconv_forward.1} parent=1 // loop_header
      %s12 = sphi 0, %s16
      %p13 = scmp.ge.s32.totalorder %s12, 4
      %s19 = sphi 0, %s31
      %s20 = sphi 0, %s27
      %s21 = sphi 0, %s19
      %s22 = sphi 0, %s20
      %s23 = sphi 0, %s21
      %s24 = sphi 0, %s22
      %s32 = sphi 0, %s32
      %s34 = sphi 0, %s32
      %s35 = sphi 0, %s34
      %s49 = sphi 0, %s35
      %s57 = sphi 0, %s59
      %s60 = sphi 0, %s57
      %s61 = sphi 0, %s60
      %s77 = sphi 0, %s61
      %s85 = sphi 0, %s87
      %s88 = sphi 0, %s85
      %s89 = sphi 0, %s88
      %s105 = sphi 0, %s89
      %s113 = sphi 0, %s115
      %s116 = sphi 0, %s113
      %s117 = sphi 0, %s116
      %s133 = sphi 0, %s117
      %s139 = sphi 0, %s141
      %s142 = sphi 0, %s139
      %s143 = sphi 0, %s142
      %s159 = sphi 0, %s143
      %s165 = sphi 0, %s167
      %s168 = sphi 0, %s165
      %s169 = sphi 0, %s168
      %s185 = sphi 0, %s169
    $region4: #{deconv_forward.1} parent=1 // loop_header_branch
      %15 = sbr.rel (%p13) target = $region8
    $region5: #{deconv_forward.1} parent=1 // loop_body
      %s17 = ssub.s32 %s12, 1
      %s18 = ssub.s32 %s12, 2
      %s25 = sadd.s32 1, %s20
      %p26 = scmp.ge.s32.totalorder %s25, 1
      %s27 = scalar_select %p26, 0, %s25
      %s28 = sadd.s32 1, %s19
      %s29 = scalar_select %p26, %s28, %s19
      %p30 = scmp.ge.s32.totalorder %s29, 2
      %s31 = scalar_select %p30, 0, %s29
      %s33 = sadd.s32 %s32, 1
      %p36 = scmp.eq.s32.totalorder %s12, 1
      %p37 = scmp.ne.s32.totalorder %s32, %s34
      %p38 = scmp.eq.s32.totalorder %s12, 0
      %p39 = por %p37, %p38
      %p40 = scmp.ne.s32.totalorder %s32, %s34
      %p41 = scmp.eq.s32.totalorder %s17, 1
      %p42 = por %p40, %p41
      %p43 = scmp.ne.s32.totalorder %s34, %s35
      %p44 = scmp.eq.s32.totalorder %s17, 0
      %p45 = por %p43, %p44
      %p46 = scmp.ne.s32.totalorder %s34, %s35
      %p47 = scmp.eq.s32.totalorder %s18, 1
      %p48 = por %p46, %p47
      %p50 = scmp.ne.s32.totalorder %s35, %s49
      %p51 = scmp.eq.s32.totalorder %s18, 0
      %p52 = por %p50, %p51
      %s53 = sadd.s32 %s19, %s20
      %s54 = sadd.s32 %s31, %s27
      %s55 = ssub.s32 %s53, %s54
      %p56 = scmp.eq.s32.totalorder %s55, 0
      %s58 = sadd.s32 %s57, 1
      %s59 = scalar_select %p56, %s57, %s58
      %p62 = pneg %p56
      %p63 = scmp.eq.s32.totalorder %s12, 1
      %p64 = por %p62, %p63
      %p65 = scmp.ne.s32.totalorder %s57, %s60
      %p66 = scmp.eq.s32.totalorder %s12, 0
      %p67 = por %p65, %p66
      %p68 = scmp.ne.s32.totalorder %s57, %s60
      %p69 = scmp.eq.s32.totalorder %s17, 1
      %p70 = por %p68, %p69
      %p71 = scmp.ne.s32.totalorder %s60, %s61
      %p72 = scmp.eq.s32.totalorder %s17, 0
      %p73 = por %p71, %p72
      %p74 = scmp.ne.s32.totalorder %s60, %s61
      %p75 = scmp.eq.s32.totalorder %s18, 1
      %p76 = por %p74, %p75
      %p78 = scmp.ne.s32.totalorder %s61, %s77
      %p79 = scmp.eq.s32.totalorder %s18, 0
      %p80 = por %p78, %p79
      %s81 = sadd.s32 %s19, %s20
      %s82 = sadd.s32 %s31, %s27
      %s83 = ssub.s32 %s81, %s82
      %p84 = scmp.eq.s32.totalorder %s83, 0
      %s86 = sadd.s32 %s85, 1
      %s87 = scalar_select %p84, %s85, %s86
      %p90 = pneg %p84
      %p91 = scmp.eq.s32.totalorder %s12, 1
      %p92 = por %p90, %p91
      %p93 = scmp.ne.s32.totalorder %s85, %s88
      %p94 = scmp.eq.s32.totalorder %s12, 0
      %p95 = por %p93, %p94
      %p96 = scmp.ne.s32.totalorder %s85, %s88
      %p97 = scmp.eq.s32.totalorder %s17, 1
      %p98 = por %p96, %p97
      %p99 = scmp.ne.s32.totalorder %s88, %s89
      %p100 = scmp.eq.s32.totalorder %s17, 0
      %p101 = por %p99, %p100
      %p102 = scmp.ne.s32.totalorder %s88, %s89
      %p103 = scmp.eq.s32.totalorder %s18, 1
      %p104 = por %p102, %p103
      %p106 = scmp.ne.s32.totalorder %s89, %s105
      %p107 = scmp.eq.s32.totalorder %s18, 0
      %p108 = por %p106, %p107
      %s109 = sadd.s32 %s19, %s20
      %s110 = sadd.s32 %s31, %s27
      %s111 = ssub.s32 %s109, %s110
      %p112 = scmp.eq.s32.totalorder %s111, 0
      %s114 = sadd.s32 %s113, 1
      %s115 = scalar_select %p112, %s113, %s114
      %p118 = pneg %p112
      %p119 = scmp.eq.s32.totalorder %s12, 1
      %p120 = por %p118, %p119
      %p121 = scmp.ne.s32.totalorder %s113, %s116
      %p122 = scmp.eq.s32.totalorder %s12, 0
      %p123 = por %p121, %p122
      %p124 = scmp.ne.s32.totalorder %s113, %s116
      %p125 = scmp.eq.s32.totalorder %s17, 1
      %p126 = por %p124, %p125
      %p127 = scmp.ne.s32.totalorder %s116, %s117
      %p128 = scmp.eq.s32.totalorder %s17, 0
      %p129 = por %p127, %p128
      %p130 = scmp.ne.s32.totalorder %s116, %s117
      %p131 = scmp.eq.s32.totalorder %s18, 1
      %p132 = por %p130, %p131
      %p134 = scmp.ne.s32.totalorder %s117, %s133
      %p135 = scmp.eq.s32.totalorder %s18, 0
      %p136 = por %p134, %p135
      %s137 = ssub.s32 %s19, %s31
      %p138 = scmp.eq.s32.totalorder %s137, 0
      %s140 = sadd.s32 %s139, 1
      %s141 = scalar_select %p138, %s139, %s140
      %p144 = pneg %p138
      %p145 = scmp.eq.s32.totalorder %s12, 1
      %p146 = por %p144, %p145
      %p147 = scmp.ne.s32.totalorder %s139, %s142
      %p148 = scmp.eq.s32.totalorder %s12, 0
      %p149 = por %p147, %p148
      %p150 = scmp.ne.s32.totalorder %s139, %s142
      %p151 = scmp.eq.s32.totalorder %s17, 1
      %p152 = por %p150, %p151
      %p153 = scmp.ne.s32.totalorder %s142, %s143
      %p154 = scmp.eq.s32.totalorder %s17, 0
      %p155 = por %p153, %p154
      %p156 = scmp.ne.s32.totalorder %s142, %s143
      %p157 = scmp.eq.s32.totalorder %s18, 1
      %p158 = por %p156, %p157
      %p160 = scmp.ne.s32.totalorder %s143, %s159
      %p161 = scmp.eq.s32.totalorder %s18, 0
      %p162 = por %p160, %p161
      %s163 = ssub.s32 %s19, %s31
      %p164 = scmp.eq.s32.totalorder %s163, 0
      %s166 = sadd.s32 %s165, 1
      %s167 = scalar_select %p164, %s165, %s166
      %p170 = pneg %p164
      %p171 = scmp.eq.s32.totalorder %s12, 1
      %p172 = por %p170, %p171
      %p173 = scmp.ne.s32.totalorder %s165, %s168
      %p174 = scmp.eq.s32.totalorder %s12, 0
      %p175 = por %p173, %p174
      %p176 = scmp.ne.s32.totalorder %s165, %s168
      %p177 = scmp.eq.s32.totalorder %s17, 1
      %p178 = por %p176, %p177
      %p179 = scmp.ne.s32.totalorder %s168, %s169
      %p180 = scmp.eq.s32.totalorder %s17, 0
      %p181 = por %p179, %p180
      %p182 = scmp.ne.s32.totalorder %s168, %s169
      %p183 = scmp.eq.s32.totalorder %s18, 1
      %p184 = por %p182, %p183
      %p186 = scmp.ne.s32.totalorder %s169, %s185
      %p187 = scmp.eq.s32.totalorder %s18, 0
      %p188 = por %p186, %p187
      %p189 = scmp.le.s32.totalorder 1, %s12
      %p190 = scmp.lt.s32.totalorder %s12, 3
      %p191 = pnand %p189, %p190
      %p192 = pneg %p191
      // Predicated region
      $region9: #{deconv_forward.1} parent=5 // pred_check
        _
      $region10: #{deconv_forward.1} parent=5 // pred_check_branch
        %194 = sbr.rel (%p191) target = $region12
      $region11: #{deconv_forward.1} parent=5 // pred_region
        %s195 = ssub.s32 %s12, 1
        // Predicated region
        $region13: #{deconv_forward.1} parent=11 // pred_check
          %p196 = pneg %p45
        $region14: #{deconv_forward.1} parent=11 // pred_check_branch
          %198 = sbr.rel (%p196) target = $region16
        $region15: #{deconv_forward.1} parent=11 // pred_region
          _
        $region16: #{deconv_forward.1} parent=11 // pred_fallthru
          _
      $region12: #{deconv_forward.1} parent=5 // pred_fallthru
        _
      %p199 = scmp.lt.s32.totalorder %s12, 2
      // Predicated region
      $region17: #{deconv_forward.1} parent=5 // pred_check
        %p200 = pneg %p199
      $region18: #{deconv_forward.1} parent=5 // pred_check_branch
        %202 = sbr.rel (%p200) target = $region20
      $region19: #{deconv_forward.1} parent=5 // pred_region
        // Predicated region
        $region21: #{deconv_forward.1} parent=19 // pred_check
          %p203 = pneg %p67
        $region22: #{deconv_forward.1} parent=19 // pred_check_branch
          %205 = sbr.rel (%p203) target = $region24
        $region23: #{deconv_forward.1} parent=19 // pred_region
          %s206 = sand.u32 %s57, 1
          %s207 = sand.u32 %s57, 1
          %s208 = smul.addr %s207, 16
          %s209 = scalar_lea.vmem [#allocation2], %s208
          %s210 = sadd.s32 %s19, %s20
          %s211 = smul.u32 2, %s210
          %s212 = smul.addr %s211, 4
          %s213 = scalar_lea.vmem %s1, %s212
          // Predicated region
          $region25: #{deconv_forward.1} parent=23 // pred_check
            _
          $region26: #{deconv_forward.1} parent=23 // pred_check_branch
            %215 = sbr.rel (0) target = $region28
          $region27: #{deconv_forward.1} parent=23 // pred_region
            // Predicated region
            $region29: #{deconv_forward.1} parent=27 // pred_check
              _
            $region30: #{deconv_forward.1} parent=27 // pred_check_branch
              %217 = sbr.rel (0) target = $region32
            $region31: #{deconv_forward.1} parent=27 // pred_region
              // Predicated region
              $region44: #{deconv_forward.1} parent=31 // pred_check
                _
              $region45: #{deconv_forward.1} parent=31 // pred_check_branch
                %235 = sbr.rel (0) target = $region47
              $region46: #{deconv_forward.1} parent=31 // pred_region
                loop: start=0, step=1, limit=1
                $region48: #{deconv_forward.1} parent=46 // loop_pre_header
                  _
                $region49: #{deconv_forward.1} parent=46 // loop_header
                  %s237 = sphi 0, %s241
                  %p238 = scmp.ge.s32.totalorder %s237, 1
                  %s242 = sphi %s213, %s213
                  %s243 = sphi %s209, %s209
                $region50: #{deconv_forward.1} parent=46 // loop_header_branch
                  %240 = sbr.rel (%p238) target = $region54
                $region51: #{deconv_forward.1} parent=46 // loop_body
                  %v244 = vld [vmem:[%s242] sm:$0xff]
                  %245 = vst [vmem:[%s243] sm:$0xff] %v244
                  %v246 = vld [vmem:[%s242 + $0x10] sm:$0xff]
                  %247 = vst [vmem:[%s243 + $0x8] sm:$0xff] %v246
                $region52: #{deconv_forward.1} parent=46 // loop_footer
                  %s241 = sadd.s32 1, %s237
                $region53: #{deconv_forward.1} parent=46 // loop_footer_branch
                  %236 = sbr.rel target = $region49
                $region54: #{deconv_forward.1} parent=46 // loop_exit
                  _
              $region47: #{deconv_forward.1} parent=31 // pred_fallthru
                _
              // Predicated region
              $region55: #{deconv_forward.1} parent=31 // pred_check
                _
              $region56: #{deconv_forward.1} parent=31 // pred_check_branch
                %249 = sbr.rel target = $region58
              $region57: #{deconv_forward.1} parent=31 // pred_region
                _
              $region58: #{deconv_forward.1} parent=31 // pred_fallthru
                _
            $region32: #{deconv_forward.1} parent=27 // pred_fallthru
              _
            // Predicated region
            $region33: #{deconv_forward.1} parent=27 // pred_check
              _
            $region34: #{deconv_forward.1} parent=27 // pred_check_branch
              %219 = sbr.rel target = $region36
            $region35: #{deconv_forward.1} parent=27 // pred_region
              %s221 = ssub.s32 256, 1
              loop: start=0, step=1, limit=1
              $region37: #{deconv_forward.1} parent=35 // loop_pre_header
                _
              $region38: #{deconv_forward.1} parent=35 // loop_header
                %s223 = sphi 0, %s227
                %p224 = scmp.ge.s32.totalorder %s223, 1
                %s228 = sphi %s213, %s213
                %s229 = sphi %s209, %s209
              $region39: #{deconv_forward.1} parent=35 // loop_header_branch
                %226 = sbr.rel (%p224) target = $region43
              $region40: #{deconv_forward.1} parent=35 // loop_body
                %v230 = vld [vmem:[%s228] sm:%s221]
                %231 = vst [vmem:[%s229] sm:%s221] %v230
                %v232 = vld [vmem:[%s228 + $0x10] sm:%s221]
                %233 = vst [vmem:[%s229 + $0x8] sm:%s221] %v232
              $region41: #{deconv_forward.1} parent=35 // loop_footer
                %s227 = sadd.s32 1, %s223
              $region42: #{deconv_forward.1} parent=35 // loop_footer_branch
                %222 = sbr.rel target = $region38
              $region43: #{deconv_forward.1} parent=35 // loop_exit
                _
            $region36: #{deconv_forward.1} parent=27 // pred_fallthru
              _
          $region28: #{deconv_forward.1} parent=23 // pred_fallthru
            _
          %250 = vnop
        $region24: #{deconv_forward.1} parent=19 // pred_fallthru
          _
        // Predicated region
        $region59: #{deconv_forward.1} parent=19 // pred_check
          %p251 = pneg %p95
        $region60: #{deconv_forward.1} parent=19 // pred_check_branch
          %253 = sbr.rel (%p251) target = $region62
        $region61: #{deconv_forward.1} parent=19 // pred_region
          %s254 = sand.u32 %s85, 1
          %s255 = sand.u32 %s85, 1
          %s256 = smul.addr %s255, 8
          %s257 = scalar_lea.vmem [#allocation3], %s256
          %s258 = sadd.s32 %s19, %s20
          %s259 = smul.u32 2, %s258
          %s260 = scalar_lea.vmem %s2, %s259
          // Predicated region
          $region63: #{deconv_forward.1} parent=61 // pred_check
            _
          $region64: #{deconv_forward.1} parent=61 // pred_check_branch
            %262 = sbr.rel (0) target = $region66
          $region65: #{deconv_forward.1} parent=61 // pred_region
            // Predicated region
            $region67: #{deconv_forward.1} parent=65 // pred_check
              _
            $region68: #{deconv_forward.1} parent=65 // pred_check_branch
              %264 = sbr.rel target = $region70
            $region69: #{deconv_forward.1} parent=65 // pred_region
              // Predicated region
              $region82: #{deconv_forward.1} parent=69 // pred_check
                _
              $region83: #{deconv_forward.1} parent=69 // pred_check_branch
                %286 = sbr.rel (0) target = $region85
              $region84: #{deconv_forward.1} parent=69 // pred_region
                loop: start=0, step=1, limit=1
                $region86: #{deconv_forward.1} parent=84 // loop_pre_header
                  _
                $region87: #{deconv_forward.1} parent=84 // loop_header
                  %s288 = sphi 0, %s292
                  %p289 = scmp.ge.s32.totalorder %s288, 1
                  %s293 = sphi %s260, %s260
                  %s294 = sphi %s257, %s257
                $region88: #{deconv_forward.1} parent=84 // loop_header_branch
                  %291 = sbr.rel (%p289) target = $region92
                $region89: #{deconv_forward.1} parent=84 // loop_body
                  _
                $region90: #{deconv_forward.1} parent=84 // loop_footer
                  %s292 = sadd.s32 1, %s288
                $region91: #{deconv_forward.1} parent=84 // loop_footer_branch
                  %287 = sbr.rel target = $region87
                $region92: #{deconv_forward.1} parent=84 // loop_exit
                  _
                %s296 = ssub.s32 4, 1
                loop: start=0, step=1, limit=1
                $region93: #{deconv_forward.1} parent=84 // loop_pre_header
                  _
                $region94: #{deconv_forward.1} parent=84 // loop_header
                  %s298 = sphi 0, %s302
                  %p299 = scmp.ge.s32.totalorder %s298, 1
                  %s303 = sphi %s260, %s260
                  %s304 = sphi %s257, %s257
                $region95: #{deconv_forward.1} parent=84 // loop_header_branch
                  %301 = sbr.rel (%p299) target = $region99
                $region96: #{deconv_forward.1} parent=84 // loop_body
                  %v305 = vld [vmem:[%s303] sm:%s296]
                  %306 = vst [vmem:[%s304] sm:%s296] %v305
                  %v307 = vld [vmem:[%s303 + $0x4] sm:%s296]
                  %308 = vst [vmem:[%s304 + $0x2] sm:%s296] %v307
                  %v309 = vld [vmem:[%s303 + $0x8] sm:%s296]
                  %310 = vst [vmem:[%s304 + $0x4] sm:%s296] %v309
                  %v311 = vld [vmem:[%s303 + $0xc] sm:%s296]
                  %312 = vst [vmem:[%s304 + $0x6] sm:%s296] %v311
                $region97: #{deconv_forward.1} parent=84 // loop_footer
                  %s302 = sadd.s32 1, %s298
                $region98: #{deconv_forward.1} parent=84 // loop_footer_branch
                  %297 = sbr.rel target = $region94
                $region99: #{deconv_forward.1} parent=84 // loop_exit
                  _
              $region85: #{deconv_forward.1} parent=69 // pred_fallthru
                _
            $region70: #{deconv_forward.1} parent=65 // pred_fallthru
              _
            // Predicated region
            $region71: #{deconv_forward.1} parent=65 // pred_check
              _
            $region72: #{deconv_forward.1} parent=65 // pred_check_branch
              %266 = sbr.rel (0) target = $region74
            $region73: #{deconv_forward.1} parent=65 // pred_region
              %s268 = ssub.s32 4, 1
              loop: start=0, step=1, limit=1
              $region75: #{deconv_forward.1} parent=73 // loop_pre_header
                _
              $region76: #{deconv_forward.1} parent=73 // loop_header
                %s270 = sphi 0, %s274
                %p271 = scmp.ge.s32.totalorder %s270, 1
                %s275 = sphi %s260, %s260
                %s276 = sphi %s257, %s257
              $region77: #{deconv_forward.1} parent=73 // loop_header_branch
                %273 = sbr.rel (%p271) target = $region81
              $region78: #{deconv_forward.1} parent=73 // loop_body
                %v277 = vld [vmem:[%s275] sm:%s268]
                %278 = vst [vmem:[%s276] sm:%s268] %v277
                %v279 = vld [vmem:[%s275 + $0x4] sm:%s268]
                %280 = vst [vmem:[%s276 + $0x2] sm:%s268] %v279
                %v281 = vld [vmem:[%s275 + $0x8] sm:%s268]
                %282 = vst [vmem:[%s276 + $0x4] sm:%s268] %v281
                %v283 = vld [vmem:[%s275 + $0xc] sm:%s268]
                %284 = vst [vmem:[%s276 + $0x6] sm:%s268] %v283
              $region79: #{deconv_forward.1} parent=73 // loop_footer
                %s274 = sadd.s32 1, %s270
              $region80: #{deconv_forward.1} parent=73 // loop_footer_branch
                %269 = sbr.rel target = $region76
              $region81: #{deconv_forward.1} parent=73 // loop_exit
                _
            $region74: #{deconv_forward.1} parent=65 // pred_fallthru
              _
          $region66: #{deconv_forward.1} parent=61 // pred_fallthru
            _
          %313 = vnop
        $region62: #{deconv_forward.1} parent=19 // pred_fallthru
          _
      $region20: #{deconv_forward.1} parent=5 // pred_fallthru
        _
      %p314 = scmp.le.s32.totalorder 1, %s12
      %p315 = scmp.lt.s32.totalorder %s12, 3
      %p316 = pnand %p314, %p315
      %p317 = pneg %p316
      // Predicated region
      $region100: #{deconv_forward.1} parent=5 // pred_check
        _
      $region101: #{deconv_forward.1} parent=5 // pred_check_branch
        %319 = sbr.rel (%p316) target = $region103
      $region102: #{deconv_forward.1} parent=5 // pred_region
        %s320 = ssub.s32 %s12, 1
        %s321 = sand.u32 %s60, 1
        %s322 = sand.u32 %s60, 1
        %s323 = smul.addr %s322, 16
        %s324 = scalar_lea.vmem [#allocation2], %s323
        // Predicated region
        $region104: #{deconv_forward.1} parent=102 // pred_check
          %p325 = pneg %p73
        $region105: #{deconv_forward.1} parent=102 // pred_check_branch
          %327 = sbr.rel (%p325) target = $region107
        $region106: #{deconv_forward.1} parent=102 // pred_region
          _
        $region107: #{deconv_forward.1} parent=102 // pred_fallthru
          _
        %s328 = sand.u32 %s88, 1
        %s329 = sand.u32 %s88, 1
        %s330 = smul.addr %s329, 8
        %s331 = scalar_lea.vmem [#allocation3], %s330
        // Predicated region
        $region108: #{deconv_forward.1} parent=102 // pred_check
          %p332 = pneg %p101
        $region109: #{deconv_forward.1} parent=102 // pred_check_branch
          %334 = sbr.rel (%p332) target = $region111
        $region110: #{deconv_forward.1} parent=102 // pred_region
          _
        $region111: #{deconv_forward.1} parent=102 // pred_fallthru
          _
        %p335 = pneg %p45
        %p336 = pneg %p42
        %s337 = sand.u32 %s60, 1
        %s338 = sand.u32 %s60, 1
        %s339 = smul.addr %s338, 16
        %s340 = scalar_lea.vmem [#allocation2], %s339
        %p341 = pneg %p73
        %p342 = pneg %p70
        %s343 = sand.u32 %s88, 1
        %s344 = sand.u32 %s88, 1
        %s345 = smul.addr %s344, 8
        %s346 = scalar_lea.vmem [#allocation3], %s345
        %p347 = pneg %p101
        %p348 = pneg %p98
        %p349 = pneg %p129
        %p350 = pneg %p126
        %s351 = sand.u32 %s116, 1
        %s352 = sand.u32 %s116, 1
        %s353 = smul.addr %s352, 32
        %s354 = scalar_lea.vmem [#allocation4], %s353
        %p355 = pneg %p155
        %p356 = pneg %p152
        %s357 = smul.u32 4, %s21
        %p358 = scmp.lt.s32.totalorder %s357, 7
        %s359 = scalar_select %p358, %s357, 7
        %s360 = smul.addr %s359, 2
        %s361 = smul.addr %s360, 8
        %s362 = scalar_lea.vmem %s4, %s361
        %p363 = pneg %p181
        %p364 = pneg %p178
        %s365 = smul.u32 4, %s21
        %p366 = scmp.lt.s32.totalorder %s365, 7
        %s367 = scalar_select %p366, %s365, 7
        %s368 = smul.addr %s367, 2
        %s369 = smul.addr %s368, 8
        %s370 = scalar_lea.vmem %s5, %s369
        %s371 = sadd.s32 %s21, %s22
        %s372 = smul.u32 2, %s371
        %s373 = sadd.s32 %s21, %s22
        %s374 = smul.u32 2, %s373
        %s375 = sadd.s32 %s21, %s22
        %s376 = smul.u32 2, %s375
        %s377 = smul.u32 4, %s21
        %p378 = scmp.lt.s32.totalorder %s377, 7
        %s379 = scalar_select %p378, %s377, 7
        %s380 = smul.addr %s379, 2
        %s381 = smul.addr %s380, 8
        %s382 = scalar_lea.vmem %s4, %s381
        %s383 = smul.u32 4, %s21
        %s384 = smul.u32 4, %s21
        %p385 = scmp.lt.s32.totalorder %s384, 7
        %s386 = scalar_select %p385, %s384, 7
        %s387 = smul.addr %s386, 2
        %s388 = smul.addr %s387, 8
        %s389 = scalar_lea.vmem %s5, %s388
        %s390 = smul.u32 4, %s21
        %p392 = scmp.eq.s32.totalorder %s22, 0
        // Predicated region
        $region112: #{deconv_forward.1} parent=102 // pred_check
          %p393 = pneg %p392
        $region113: #{deconv_forward.1} parent=102 // pred_check_branch
          %395 = sbr.rel (%p393) target = $region115
        $region114: #{deconv_forward.1} parent=102 // pred_region
          %396 = vst [vmem:[%s382] sm:$0xff] 0.0
          %397 = vst [vmem:[%s382 + $0x8] sm:$0xff] 0.0
          %398 = vst [vmem:[%s382 + $0x10] sm:$0xff] 0.0
          %399 = vst [vmem:[%s382 + $0x18] sm:$0xff] 0.0
          %400 = vst [vmem:[%s382 + $0x20] sm:$0xff] 0.0
          %401 = vst [vmem:[%s382 + $0x28] sm:$0xff] 0.0
          %402 = vst [vmem:[%s382 + $0x30] sm:$0xff] 0.0
          %403 = vst [vmem:[%s382 + $0x38] sm:$0xff] 0.0
          %404 = vst [vmem:[%s389] sm:$0xff] 0.0
          %405 = vst [vmem:[%s389 + $0x8] sm:$0xff] 0.0
          %406 = vst [vmem:[%s389 + $0x10] sm:$0xff] 0.0
          %407 = vst [vmem:[%s389 + $0x18] sm:$0xff] 0.0
          %408 = vst [vmem:[%s389 + $0x20] sm:$0xff] 0.0
          %409 = vst [vmem:[%s389 + $0x28] sm:$0xff] 0.0
          %410 = vst [vmem:[%s389 + $0x30] sm:$0xff] 0.0
          %411 = vst [vmem:[%s389 + $0x38] sm:$0xff] 0.0
        $region115: #{deconv_forward.1} parent=102 // pred_fallthru
          _
        %v412 = vld [vmem:[%s0] sm:$0xf]
        %v413 = vld [vmem:[%s0 + $0x4] sm:$0xf]
        %v414 = vld [vmem:[%s0 + $0x8] sm:$0xf]
        %v415 = vld [vmem:[%s0 + $0xc] sm:$0xf]
        %v416 = vld [vmem:[%s324] sm:$0xff]
        %v417 = vld [vmem:[%s324 + $0x8] sm:$0xff]
        %v422 = vunpack.c.l.b16 %v412
        %v423 = vunpack.c.l.b16 %v413
        %v424 = vunpack.c.l.b16 %v414
        %v425 = vunpack.c.l.b16 %v415
        %v426 = vpack.c.b16 %v423, %v422
        %v427 = vpack.c.b16 %v425, %v424
        %v430 = vunpack.c.l.b16 %v416
        %v431 = vunpack.c.h.b16 %v416
        %v432 = vunpack.c.l.b16 %v417
        %v433 = vunpack.c.h.b16 %v417
        %v434 = vpack.c.b16 %v432, %v430
        %v435 = vpack.c.b16 %v433, %v431
        %vm438 = vcmask 130048
        %v440 = vsel %vm438, %v426, 0
        %v443 = vsel %vm438, %v427, 0
        %445 = vmatpush.bf16.msra.mxu0 0
        %446 = vmatpush.bf16.msra.mxu0 0
        %447 = vmatpush.bf16.msra.mxu0 0
        %448 = vmatpush.bf16.msra.mxu0 0
        %449 = vmatpush.bf16.msra.mxu0 0
        %450 = vmatpush.bf16.msra.mxu0 0
        %451 = vmatpush.bf16.msra.mxu0 0
        %452 = vmatpush.bf16.msra.mxu0 %v434
        %453 = vmatmul.bf16.gmra.mxu0 %v440
        %v454 = vpop.f32.mrf.mxu0
        %v455 = vadd.f32 0.0, %v454
        %v456 = vpop.f32.mrf.mxu0
        %v457 = vadd.f32 0.0, %v456
        %458 = vmatmul.bf16.gmra.mxu0 %v443
        %v459 = vpop.f32.mrf.mxu0
        %v460 = vadd.f32 0.0, %v459
        %v461 = vpop.f32.mrf.mxu0
        %v462 = vadd.f32 0.0, %v461
        %463 = vdwg.mxu0
        %464 = vmatpush.bf16.msra.mxu0 0
        %465 = vmatpush.bf16.msra.mxu0 0
        %466 = vmatpush.bf16.msra.mxu0 0
        %467 = vmatpush.bf16.msra.mxu0 0
        %468 = vmatpush.bf16.msra.mxu0 0
        %469 = vmatpush.bf16.msra.mxu0 0
        %470 = vmatpush.bf16.msra.mxu0 0
        %471 = vmatpush.bf16.msra.mxu0 %v435
        %472 = vmatmul.bf16.gmra.mxu0 %v440
        %v473 = vpop.f32.mrf.mxu0
        %v474 = vadd.f32 0.0, %v473
        %v475 = vpop.f32.mrf.mxu0
        %v476 = vadd.f32 0.0, %v475
        %477 = vmatmul.bf16.gmra.mxu0 %v443
        %v478 = vpop.f32.mrf.mxu0
        %v479 = vadd.f32 0.0, %v478
        %v480 = vpop.f32.mrf.mxu0
        %v481 = vadd.f32 0.0, %v480
        %482 = vdwg.mxu0
        %v483 = vld [vmem:[%s331] sm:$0x3]
        %v484 = vld [vmem:[%s331 + $0x2] sm:$0x3]
        %v485 = vld [vmem:[%s331 + $0x4] sm:$0x3]
        %v486 = vld [vmem:[%s331 + $0x6] sm:$0x3]
        %v491 = vperm.slane %v483, 0
        %v492 = vperm.slane %v483, 1
        %v493 = vperm.slane %v484, 0
        %v494 = vperm.slane %v484, 1
        %v495 = vperm.slane %v485, 0
        %v496 = vperm.slane %v485, 1
        %v497 = vperm.slane %v486, 0
        %v498 = vperm.slane %v486, 1
        %v507 = vmul.f32 %v455, %v491
        %v508 = vmul.f32 %v474, %v492
        %v509 = vmul.f32 %v457, %v493
        %v510 = vmul.f32 %v476, %v494
        %v511 = vmul.f32 %v460, %v495
        %v512 = vmul.f32 %v479, %v496
        %v513 = vmul.f32 %v462, %v497
        %v514 = vmul.f32 %v481, %v498
        %v515 = vpack.c.bf16 %v508, %v507
        %v516 = vpack.c.bf16 %v510, %v509
        %v517 = vpack.c.bf16 %v512, %v511
        %v518 = vpack.c.bf16 %v514, %v513
        %519 = vst [vmem:[%s354] sm:$0xff] %v515
        %520 = vst [vmem:[%s354 + $0x8] sm:$0xff] %v516
        %521 = vst [vmem:[%s354 + $0x10] sm:$0xff] %v517
        %522 = vst [vmem:[%s354 + $0x18] sm:$0xff] %v518
        %v523 = vld [vmem:[%s382] sm:$0xff]
        %v524 = vld [vmem:[%s382 + $0x8] sm:$0xff]
        %v525 = vld [vmem:[%s382 + $0x10] sm:$0xff]
        %v526 = vld [vmem:[%s382 + $0x18] sm:$0xff]
        %v527 = vld [vmem:[%s382 + $0x20] sm:$0xff]
        %v528 = vld [vmem:[%s382 + $0x28] sm:$0xff]
        %v529 = vld [vmem:[%s382 + $0x30] sm:$0xff]
        %v530 = vld [vmem:[%s382 + $0x38] sm:$0xff]
        %v531 = vadd.f32 %v523, %v507
        %v532 = vadd.f32 %v524, %v508
        %v533 = vadd.f32 %v525, %v509
        %v534 = vadd.f32 %v526, %v510
        %v535 = vadd.f32 %v527, %v511
        %v536 = vadd.f32 %v528, %v512
        %v537 = vadd.f32 %v529, %v513
        %v538 = vadd.f32 %v530, %v514
        %539 = vst [vmem:[%s382] sm:$0xff] %v531
        %540 = vst [vmem:[%s382 + $0x8] sm:$0xff] %v532
        %541 = vst [vmem:[%s382 + $0x10] sm:$0xff] %v533
        %542 = vst [vmem:[%s382 + $0x18] sm:$0xff] %v534
        %543 = vst [vmem:[%s382 + $0x20] sm:$0xff] %v535
        %544 = vst [vmem:[%s382 + $0x28] sm:$0xff] %v536
        %545 = vst [vmem:[%s382 + $0x30] sm:$0xff] %v537
        %546 = vst [vmem:[%s382 + $0x38] sm:$0xff] %v538
        %v547 = vld [vmem:[%s389] sm:$0xff]
        %v548 = vld [vmem:[%s389 + $0x8] sm:$0xff]
        %v549 = vld [vmem:[%s389 + $0x10] sm:$0xff]
        %v550 = vld [vmem:[%s389 + $0x18] sm:$0xff]
        %v551 = vld [vmem:[%s389 + $0x20] sm:$0xff]
        %v552 = vld [vmem:[%s389 + $0x28] sm:$0xff]
        %v553 = vld [vmem:[%s389 + $0x30] sm:$0xff]
        %v554 = vld [vmem:[%s389 + $0x38] sm:$0xff]
        %v555 = vmul.f32 %v507, %v507
        %v556 = vmul.f32 %v508, %v508
        %v557 = vmul.f32 %v509, %v509
        %v558 = vmul.f32 %v510, %v510
        %v559 = vmul.f32 %v511, %v511
        %v560 = vmul.f32 %v512, %v512
        %v561 = vmul.f32 %v513, %v513
        %v562 = vmul.f32 %v514, %v514
        %v563 = vadd.f32 %v547, %v555
        %v564 = vadd.f32 %v548, %v556
        %v565 = vadd.f32 %v549, %v557
        %v566 = vadd.f32 %v550, %v558
        %v567 = vadd.f32 %v551, %v559
        %v568 = vadd.f32 %v552, %v560
        %v569 = vadd.f32 %v553, %v561
        %v570 = vadd.f32 %v554, %v562
        %571 = vst [vmem:[%s389] sm:$0xff] %v563
        %572 = vst [vmem:[%s389 + $0x8] sm:$0xff] %v564
        %573 = vst [vmem:[%s389 + $0x10] sm:$0xff] %v565
        %574 = vst [vmem:[%s389 + $0x18] sm:$0xff] %v566
        %575 = vst [vmem:[%s389 + $0x20] sm:$0xff] %v567
        %576 = vst [vmem:[%s389 + $0x28] sm:$0xff] %v568
        %577 = vst [vmem:[%s389 + $0x30] sm:$0xff] %v569
        %578 = vst [vmem:[%s389 + $0x38] sm:$0xff] %v570
        %s579 = sand.u32 %s116, 1
        %s580 = sand.u32 %s116, 1
        %s581 = smul.addr %s580, 32
        %s582 = scalar_lea.vmem [#allocation4], %s581
        %s583 = smul.u32 4, %s21
        %p584 = scmp.lt.s32.totalorder %s583, 7
        %s585 = scalar_select %p584, %s583, 7
        %s586 = smul.addr %s585, 2
        %s587 = smul.addr %s586, 8
        %s588 = scalar_lea.vmem %s4, %s587
        %s589 = smul.u32 4, %s21
        %p590 = scmp.lt.s32.totalorder %s589, 7
        %s591 = scalar_select %p590, %s589, 7
        %s592 = smul.addr %s591, 2
        %s593 = smul.addr %s592, 8
        %s594 = scalar_lea.vmem %s5, %s593
        // Predicated region
        $region116: #{deconv_forward.1} parent=102 // pred_check
          %p595 = pneg %p126
        $region117: #{deconv_forward.1} parent=102 // pred_check_branch
          %597 = sbr.rel (%p595) target = $region119
        $region118: #{deconv_forward.1} parent=102 // pred_region
          %s598 = sadd.s32 %s21, %s22
          %s599 = smul.u32 2, %s598
          %s600 = smul.addr %s599, 4
          %s601 = scalar_lea.vmem %s3, %s600
          // Predicated region
          $region120: #{deconv_forward.1} parent=118 // pred_check
            _
          $region121: #{deconv_forward.1} parent=118 // pred_check_branch
            %603 = sbr.rel (0) target = $region123
          $region122: #{deconv_forward.1} parent=118 // pred_region
            // Predicated region
            $region124: #{deconv_forward.1} parent=122 // pred_check
              _
            $region125: #{deconv_forward.1} parent=122 // pred_check_branch
              %605 = sbr.rel (0) target = $region127
            $region126: #{deconv_forward.1} parent=122 // pred_region
              // Predicated region
              $region139: #{deconv_forward.1} parent=126 // pred_check
                _
              $region140: #{deconv_forward.1} parent=126 // pred_check_branch
                %627 = sbr.rel (0) target = $region142
              $region141: #{deconv_forward.1} parent=126 // pred_region
                loop: start=0, step=1, limit=1
                $region143: #{deconv_forward.1} parent=141 // loop_pre_header
                  _
                $region144: #{deconv_forward.1} parent=141 // loop_header
                  %s629 = sphi 0, %s633
                  %p630 = scmp.ge.s32.totalorder %s629, 1
                  %s634 = sphi %s582, %s582
                  %s635 = sphi %s601, %s601
                $region145: #{deconv_forward.1} parent=141 // loop_header_branch
                  %632 = sbr.rel (%p630) target = $region149
                $region146: #{deconv_forward.1} parent=141 // loop_body
                  %v636 = vld [vmem:[%s634] sm:$0xff]
                  %637 = vst [vmem:[%s635] sm:$0xff] %v636
                  %v638 = vld [vmem:[%s634 + $0x8] sm:$0xff]
                  %639 = vst [vmem:[%s635 + $0x10] sm:$0xff] %v638
                  %v640 = vld [vmem:[%s634 + $0x10] sm:$0xff]
                  %641 = vst [vmem:[%s635 + $0x20] sm:$0xff] %v640
                  %v642 = vld [vmem:[%s634 + $0x18] sm:$0xff]
                  %643 = vst [vmem:[%s635 + $0x30] sm:$0xff] %v642
                $region147: #{deconv_forward.1} parent=141 // loop_footer
                  %s633 = sadd.s32 1, %s629
                $region148: #{deconv_forward.1} parent=141 // loop_footer_branch
                  %628 = sbr.rel target = $region144
                $region149: #{deconv_forward.1} parent=141 // loop_exit
                  _
              $region142: #{deconv_forward.1} parent=126 // pred_fallthru
                _
              // Predicated region
              $region150: #{deconv_forward.1} parent=126 // pred_check
                _
              $region151: #{deconv_forward.1} parent=126 // pred_check_branch
                %645 = sbr.rel target = $region153
              $region152: #{deconv_forward.1} parent=126 // pred_region
                _
              $region153: #{deconv_forward.1} parent=126 // pred_fallthru
                _
            $region127: #{deconv_forward.1} parent=122 // pred_fallthru
              _
            // Predicated region
            $region128: #{deconv_forward.1} parent=122 // pred_check
              _
            $region129: #{deconv_forward.1} parent=122 // pred_check_branch
              %607 = sbr.rel target = $region131
            $region130: #{deconv_forward.1} parent=122 // pred_region
              %s609 = ssub.s32 256, 1
              loop: start=0, step=1, limit=1
              $region132: #{deconv_forward.1} parent=130 // loop_pre_header
                _
              $region133: #{deconv_forward.1} parent=130 // loop_header
                %s611 = sphi 0, %s615
                %p612 = scmp.ge.s32.totalorder %s611, 1
                %s616 = sphi %s582, %s582
                %s617 = sphi %s601, %s601
              $region134: #{deconv_forward.1} parent=130 // loop_header_branch
                %614 = sbr.rel (%p612) target = $region138
              $region135: #{deconv_forward.1} parent=130 // loop_body
                %v618 = vld [vmem:[%s616] sm:%s609]
                %619 = vst [vmem:[%s617] sm:%s609] %v618
                %v620 = vld [vmem:[%s616 + $0x8] sm:%s609]
                %621 = vst [vmem:[%s617 + $0x10] sm:%s609] %v620
                %v622 = vld [vmem:[%s616 + $0x10] sm:%s609]
                %623 = vst [vmem:[%s617 + $0x20] sm:%s609] %v622
                %v624 = vld [vmem:[%s616 + $0x18] sm:%s609]
                %625 = vst [vmem:[%s617 + $0x30] sm:%s609] %v624
              $region136: #{deconv_forward.1} parent=130 // loop_footer
                %s615 = sadd.s32 1, %s611
              $region137: #{deconv_forward.1} parent=130 // loop_footer_branch
                %610 = sbr.rel target = $region133
              $region138: #{deconv_forward.1} parent=130 // loop_exit
                _
            $region131: #{deconv_forward.1} parent=122 // pred_fallthru
              _
          $region123: #{deconv_forward.1} parent=118 // pred_fallthru
            _
          %646 = vnop
        $region119: #{deconv_forward.1} parent=102 // pred_fallthru
          _
        // Predicated region
        $region154: #{deconv_forward.1} parent=102 // pred_check
          %p647 = pneg %p152
        $region155: #{deconv_forward.1} parent=102 // pred_check_branch
          %649 = sbr.rel (%p647) target = $region157
        $region156: #{deconv_forward.1} parent=102 // pred_region
          %s650 = smul.u32 4, %s21
        $region157: #{deconv_forward.1} parent=102 // pred_fallthru
          _
        // Predicated region
        $region158: #{deconv_forward.1} parent=102 // pred_check
          %p651 = pneg %p178
        $region159: #{deconv_forward.1} parent=102 // pred_check_branch
          %653 = sbr.rel (%p651) target = $region161
        $region160: #{deconv_forward.1} parent=102 // pred_region
          %s654 = smul.u32 4, %s21
        $region161: #{deconv_forward.1} parent=102 // pred_fallthru
          _
      $region103: #{deconv_forward.1} parent=5 // pred_fallthru
        _
      %p655 = scmp.le.s32.totalorder 2, %s12
      // Predicated region
      $region162: #{deconv_forward.1} parent=5 // pred_check
        %p656 = pneg %p655
      $region163: #{deconv_forward.1} parent=5 // pred_check_branch
        %658 = sbr.rel (%p656) target = $region165
      $region164: #{deconv_forward.1} parent=5 // pred_region
        %s659 = ssub.s32 %s12, 2
        // Predicated region
        $region166: #{deconv_forward.1} parent=164 // pred_check
          %p660 = pneg %p132
        $region167: #{deconv_forward.1} parent=164 // pred_check_branch
          %662 = sbr.rel (%p660) target = $region169
        $region168: #{deconv_forward.1} parent=164 // pred_region
          %s663 = sand.u32 %s117, 1
          %s664 = sand.u32 %s117, 1
          %s665 = smul.addr %s664, 32
          %s666 = scalar_lea.vmem [#allocation4], %s665
        $region169: #{deconv_forward.1} parent=164 // pred_fallthru
          _
        // Predicated region
        $region170: #{deconv_forward.1} parent=164 // pred_check
          %p667 = pneg %p158
        $region171: #{deconv_forward.1} parent=164 // pred_check_branch
          %669 = sbr.rel (%p667) target = $region173
        $region172: #{deconv_forward.1} parent=164 // pred_region
          %s670 = smul.u32 4, %s23
          %p671 = scmp.lt.s32.totalorder %s670, 7
          %s672 = scalar_select %p671, %s670, 7
          %s673 = smul.addr %s672, 2
          %s674 = smul.addr %s673, 8
          %s675 = scalar_lea.vmem %s4, %s674
        $region173: #{deconv_forward.1} parent=164 // pred_fallthru
          _
        // Predicated region
        $region174: #{deconv_forward.1} parent=164 // pred_check
          %p676 = pneg %p184
        $region175: #{deconv_forward.1} parent=164 // pred_check_branch
          %678 = sbr.rel (%p676) target = $region177
        $region176: #{deconv_forward.1} parent=164 // pred_region
          %s679 = smul.u32 4, %s23
          %p680 = scmp.lt.s32.totalorder %s679, 7
          %s681 = scalar_select %p680, %s679, 7
          %s682 = smul.addr %s681, 2
          %s683 = smul.addr %s682, 8
          %s684 = scalar_lea.vmem %s5, %s683
        $region177: #{deconv_forward.1} parent=164 // pred_fallthru
          _
      $region165: #{deconv_forward.1} parent=5 // pred_fallthru
        _
    $region6: #{deconv_forward.1} parent=1 // loop_footer
      %s16 = sadd.s32 1, %s12
    $region7: #{deconv_forward.1} parent=1 // loop_footer_branch
      %11 = sbr.rel target = $region3
    $region8: #{deconv_forward.1} parent=1 // loop_exit
      _

</llo_original>
